<compile_context>
chip_gen: v6e
topology: v6e:2x2x1
jax: 0.10.0
libtpu: 0.0.40
codegen_flags: <defaults>
</compile_context>

<pallas_src>
import math

import jax
import jax.numpy as jnp
from jax.experimental import pallas as pl
from jax.experimental.pallas import tpu as pltpu


def _make_kernel(tanh_dtype):
    def metanet_kernel(x_ref, w1_ref, b1_ref, w23_ref, b23_ref, w4_ref, b4_ref, o_ref):
        # x_ref: (40, TB) -- rows are (seq s, feat f) flattened; batch on lanes.
        x = x_ref[...]

        # net1[0..1]: block-diagonal Linear(5,32) over the 8 seq positions, + tanh.
        a1 = jnp.dot(w1_ref[...], x, preferred_element_type=jnp.float32) + b1_ref[...]
        h1 = jnp.tanh(a1.astype(tanh_dtype)).astype(w23_ref.dtype)      # (256, TB)

        # net1[2] o transpose(1,2) o net2[0] fused: one (112,256)x(256,TB) matmul, + tanh.
        a2 = jnp.dot(w23_ref[...], h1, preferred_element_type=jnp.float32) + b23_ref[...]
        h2 = jnp.tanh(a2.astype(tanh_dtype)).astype(w4_ref.dtype)       # (112, TB)

        # net2[2]: Linear(16,1) as block-diagonal (8,112) (7 real rows + 1 zero pad)
        # -> lane/sublane-dense (8, TB) output tile.
        o_ref[...] = (
            jnp.dot(w4_ref[...], h2, preferred_element_type=jnp.float32) + b4_ref[...]
        ).astype(o_ref.dtype)

    return metanet_kernel


def _round_up(x, n):
    return ((x + n - 1) // n) * n


def metanet_forward(m, params, *, block_b=8192, compute_dtype=jnp.bfloat16,
                    tanh_dtype=None):
    """m: (B, 8, 5) float32 -> (B, 7) float32.

    compute_dtype: matmul-operand dtype (bf16 default: native MXU on v5e/v6e/v7x).
    tanh_dtype: dtype for the tanh/bias stage; defaults to compute_dtype (bf16 EUP
      on v6e/v7x). On v5e (no bf16 EUP/VPU) pass tanh_dtype=jnp.float32.
    """
    B, S, F = m.shape
    assert (S, F) == (8, 5)
    if tanh_dtype is None:
        tanh_dtype = compute_dtype
    w1, b1, w2, b2, w3, b3, w4, b4 = params   # weights stored (in, out); biases (1, out)
    f32 = jnp.float32

    # ---- host-side fused operands (tiny; pure broadcast/elementwise math) ----
    # Block-diagonal Linear(5,32) per seq position, transposed for weights-as-LHS.
    w1t = jnp.kron(jnp.eye(8, dtype=f32), w1.astype(f32)).T.astype(compute_dtype)  # (256, 40)
    b1c = jnp.tile(b1.astype(f32).reshape(1, 32), (8, 1)).reshape(256, 1)           # (256, 1) f32
    # Fused Linear(32,7) o transpose(1,2) o Linear(8,16):
    #   W23[(s,c),(o,k)] = w2[c,o] * w3[s,k];  b23[o,k] = b2[o]*sum_s w3[s,k] + b3[k]
    w23 = (w2.astype(f32)[None, :, :, None] *
           w3.astype(f32)[:, None, None, :]).reshape(256, 112)
    w23t = w23.T.astype(compute_dtype)                                               # (112, 256)
    b23c = (b2.astype(f32).reshape(7, 1) * w3.astype(f32).sum(axis=0).reshape(1, 16)
            + b3.astype(f32).reshape(1, 16)).reshape(112, 1)                          # (112, 1) f32
    # Final Linear(16,1) block-diagonal over the 7 outputs, padded 7 -> 8 (zero row)
    # so the output tile is a full (8,128) sublane tile (unmasked vst).
    w4t = jnp.kron(jnp.eye(7, dtype=f32), w4.astype(f32)).T                            # (7, 112)
    w4t = jnp.pad(w4t, ((0, 1), (0, 0))).astype(compute_dtype)                         # (8, 112)
    b4c = jnp.pad(jnp.tile(b4.astype(f32).reshape(1, 1), (7, 1)), ((0, 1), (0, 0)))    # (8, 1) f32

    # ---- activations: features on sublanes, batch on lanes; cast before transposing
    # so the staged buffer already carries compute_dtype (half the HBM bytes for bf16).
    xt = jnp.transpose(m.astype(compute_dtype), (1, 2, 0)).reshape(40, B)              # (40, B)

    # Tile selection: big tiles amortize the ~0.35 us per-step overhead, but keep
    # >= 2 grid steps when possible so the "parallel" axis can shard across v7x's 2 TCs.
    tb = _round_up(max(128, min(block_b, _round_up(B, 128))), 128)
    if B > 128:
        tb = min(tb, _round_up(pl.cdiv(B, 2), 128))
    bp = _round_up(B, tb)
    if bp != B:
        xt = jnp.pad(xt, ((0, 0), (0, bp - B)))

    in_itemsize = jnp.dtype(compute_dtype).itemsize
    cost = pl.CostEstimate(
        flops=2 * bp * (40 * 256 + 256 * 112 + 112 * 8),
        transcendentals=bp * (256 + 112),
        bytes_accessed=int(bp * 40 * in_itemsize + bp * 8 * 4
                           + (256 * 40 + 112 * 256 + 8 * 112) * in_itemsize
                           + (256 + 112 + 8) * 4),
    )

    out = pl.pallas_call(
        _make_kernel(tanh_dtype),
        grid=(bp // tb,),
        in_specs=[
            pl.BlockSpec((40, tb), lambda i: (0, i)),       # input batch tile (pipelined)
            pl.BlockSpec((256, 40), lambda i: (0, 0)),      # resident weights / biases:
            pl.BlockSpec((256, 1), lambda i: (0, 0)),
            pl.BlockSpec((112, 256), lambda i: (0, 0)),
            pl.BlockSpec((112, 1), lambda i: (0, 0)),
            pl.BlockSpec((8, 112), lambda i: (0, 0)),
            pl.BlockSpec((8, 1), lambda i: (0, 0)),
        ],
        out_specs=pl.BlockSpec((8, tb), lambda i: (0, i)),  # lane/sublane-dense output tile
        out_shape=jax.ShapeDtypeStruct((8, bp), jnp.float32),
        compiler_params=pltpu.CompilerParams(
            dimension_semantics=("parallel",),              # megacore-shard the batch axis
            vmem_limit_bytes=48 * 1024 * 1024,              # fits v5e/v6e/v7x; room for TB=8192
        ),
        cost_estimate=cost,
    )(xt, w1t, b1c, w23t, b23c, w4t, b4c)

    # (8, Bp) -> (B, 7): drop the pad row / pad columns; pure glue outside the kernel.
    # TODO(synk): callers that can consume (7, B) directly should skip this transpose.
    return out[:7, :B].T


def init_params(key):
    """Deterministic PyTorch-style Linear init (uniform +/- 1/sqrt(fan_in))."""
    ks = jax.random.split(key, 8)

    def lin(kw, kb, fan_in, fan_out):
        bound = 1.0 / math.sqrt(fan_in)
        w = jax.random.uniform(kw, (fan_in, fan_out), jnp.float32, -bound, bound)
        b = jax.random.uniform(kb, (1, fan_out), jnp.float32, -bound, bound)
        return w, b

    w1, b1 = lin(ks[0], ks[1], 5, 32)   # net1[0]: Linear(5, 32)
    w2, b2 = lin(ks[2], ks[3], 32, 7)   # net1[2]: Linear(32, 7)
    w3, b3 = lin(ks[4], ks[5], 8, 16)   # net2[0]: Linear(8, 16)
    w4, b4 = lin(ks[6], ks[7], 16, 1)   # net2[2]: Linear(16, 1)
    return (w1, b1, w2, b2, w3, b3, w4, b4)


def metanet_ref(m, params):
    """Pure-JAX reference of the PyTorch forward (scoped high-precision matmuls)."""
    w1, b1, w2, b2, w3, b3, w4, b4 = params
    with jax.default_matmul_precision("highest"):
        h = jnp.tanh(m @ w1 + b1)                 # (B, 8, 32)
        y = h @ w2 + b2                           # (B, 8, 7)
        yt = jnp.swapaxes(y, 1, 2)                # (B, 7, 8)
        h2 = jnp.tanh(yt @ w3 + b3)               # (B, 7, 16)
        out = h2 @ w4 + b4                        # (B, 7, 1)
    return out[..., 0]                            # Flatten(start_dim=1) -> (B, 7)


if __name__ == "__main__":
    key = jax.random.PRNGKey(0)
    kx, kp = jax.random.split(key)
    params = init_params(kp)

    # Small demo batch (single 128-lane tile), default bf16 compute path.
    B = 2
    m = jax.random.normal(kx, (B, 8, 5), jnp.float32)
    out = jax.block_until_ready(metanet_forward(m, params))
    ref = metanet_ref(m, params)
    assert out.shape == (B, 7), out.shape
    assert jnp.allclose(out, ref, atol=1e-1, rtol=1e-1), (out, ref)

    # f32 compute path (tighter tolerance; f32 accumulation everywhere).
    out_f32 = jax.block_until_ready(
        metanet_forward(m, params, compute_dtype=jnp.float32))
    assert out_f32.shape == (B, 7)
    assert jnp.allclose(out_f32, ref, atol=1e-2, rtol=1e-2), (out_f32, ref)

    # Larger batch exercising >= 2 grid steps (megacore-shardable) + padding slice-off.
    B2 = 1000
    m2 = jax.random.normal(jax.random.PRNGKey(1), (B2, 8, 5), jnp.float32)
    out2 = jax.block_until_ready(metanet_forward(m2, params))
    ref2 = metanet_ref(m2, params)
    assert out2.shape == (B2, 7), out2.shape
    assert jnp.allclose(out2, ref2, atol=1e-1, rtol=1e-1)

    # v5e-style dtype plumbing: bf16 matmuls, f32 tanh/bias path.
    out_v5e = jax.block_until_ready(
        metanet_forward(m2, params, tanh_dtype=jnp.float32))
    assert out_v5e.shape == (B2, 7)
    assert jnp.allclose(out_v5e, ref2, atol=1e-1, rtol=1e-1)

    print("KERNEL_OK")
</pallas_src>

<mosaic_0001>
module attributes {stable_mosaic.version = 11 : i64} {
  func.func @metanet_kernel(%arg0: i32, %arg1: memref<40x128xbf16, #tpu.memory_space<vmem>>, %arg2: memref<256x40xbf16, #tpu.memory_space<vmem>>, %arg3: memref<256x1xf32, #tpu.memory_space<vmem>>, %arg4: memref<112x256xbf16, #tpu.memory_space<vmem>>, %arg5: memref<112x1xf32, #tpu.memory_space<vmem>>, %arg6: memref<8x112xbf16, #tpu.memory_space<vmem>>, %arg7: memref<8x1xf32, #tpu.memory_space<vmem>>, %arg8: memref<8x128xf32, #tpu.memory_space<vmem>>) attributes {dimension_semantics = [#tpu.dimension_semantics<parallel>], iteration_bounds = array<i64: 1>, scalar_prefetch = 0 : i64, scratch_operands = 0 : i64, tpu.core_type = #tpu.core_type<tc>, window_params = [{transform_indices = @transform_0, window_bounds = array<i64: 40, 128>}, {pipeline_mode = #tpu.pipeline_mode<synchronous>, transform_indices = @transform_1, window_bounds = array<i64: 256, 40>}, {pipeline_mode = #tpu.pipeline_mode<synchronous>, transform_indices = @transform_2, window_bounds = array<i64: 256, 1>}, {pipeline_mode = #tpu.pipeline_mode<synchronous>, transform_indices = @transform_3, window_bounds = array<i64: 112, 256>}, {pipeline_mode = #tpu.pipeline_mode<synchronous>, transform_indices = @transform_4, window_bounds = array<i64: 112, 1>}, {pipeline_mode = #tpu.pipeline_mode<synchronous>, transform_indices = @transform_5, window_bounds = array<i64: 8, 112>}, {pipeline_mode = #tpu.pipeline_mode<synchronous>, transform_indices = @transform_6, window_bounds = array<i64: 8, 1>}, {transform_indices = @transform_7, window_bounds = array<i64: 8, 128>}]} {
    %c0 = arith.constant 0 : index
    %c0_0 = arith.constant 0 : index
    %0 = vector.load %arg1[%c0, %c0_0] : memref<40x128xbf16, #tpu.memory_space<vmem>>, vector<40x128xbf16>
    %c0_1 = arith.constant 0 : index
    %c0_2 = arith.constant 0 : index
    %1 = vector.load %arg2[%c0_1, %c0_2] : memref<256x40xbf16, #tpu.memory_space<vmem>>, vector<256x40xbf16>
    %cst = arith.constant dense<0.000000e+00> : vector<256x128xf32>
    %2 = tpu.matmul %1, %0, %cst {dimension_numbers = #tpu.dot_dimension_numbers<[1], [0], [0], [1], [0, 0, 1, 1], [], []>} : vector<256x40xbf16>, vector<40x128xbf16>, vector<256x128xf32> -> vector<256x128xf32>
    %c0_3 = arith.constant 0 : index
    %c0_4 = arith.constant 0 : index
    %3 = vector.load %arg3[%c0_3, %c0_4] : memref<256x1xf32, #tpu.memory_space<vmem>>, vector<256x1xf32>
    %4 = vector.broadcast %3 : vector<256x1xf32> to vector<256x128xf32>
    %5 = arith.addf %2, %4 : vector<256x128xf32>
    %6 = arith.truncf %5 : vector<256x128xf32> to vector<256x128xbf16>
    %7 = math.tanh %6 : vector<256x128xbf16>
    %c0_5 = arith.constant 0 : index
    %c0_6 = arith.constant 0 : index
    %8 = vector.load %arg4[%c0_5, %c0_6] : memref<112x256xbf16, #tpu.memory_space<vmem>>, vector<112x256xbf16>
    %cst_7 = arith.constant dense<0.000000e+00> : vector<112x128xf32>
    %9 = tpu.matmul %8, %7, %cst_7 {dimension_numbers = #tpu.dot_dimension_numbers<[1], [0], [0], [1], [0, 0, 1, 1], [], []>} : vector<112x256xbf16>, vector<256x128xbf16>, vector<112x128xf32> -> vector<112x128xf32>
    %c0_8 = arith.constant 0 : index
    %c0_9 = arith.constant 0 : index
    %10 = vector.load %arg5[%c0_8, %c0_9] : memref<112x1xf32, #tpu.memory_space<vmem>>, vector<112x1xf32>
    %11 = vector.broadcast %10 : vector<112x1xf32> to vector<112x128xf32>
    %12 = arith.addf %9, %11 : vector<112x128xf32>
    %13 = arith.truncf %12 : vector<112x128xf32> to vector<112x128xbf16>
    %14 = math.tanh %13 : vector<112x128xbf16>
    %c0_10 = arith.constant 0 : index
    %c0_11 = arith.constant 0 : index
    %15 = vector.load %arg6[%c0_10, %c0_11] : memref<8x112xbf16, #tpu.memory_space<vmem>>, vector<8x112xbf16>
    %cst_12 = arith.constant dense<0.000000e+00> : vector<8x128xf32>
    %16 = tpu.matmul %15, %14, %cst_12 {dimension_numbers = #tpu.dot_dimension_numbers<[1], [0], [0], [1], [0, 0, 1, 1], [], []>} : vector<8x112xbf16>, vector<112x128xbf16>, vector<8x128xf32> -> vector<8x128xf32>
    %c0_13 = arith.constant 0 : index
    %c0_14 = arith.constant 0 : index
    %17 = vector.load %arg7[%c0_13, %c0_14] : memref<8x1xf32, #tpu.memory_space<vmem>>, vector<8x1xf32>
    %18 = vector.broadcast %17 : vector<8x1xf32> to vector<8x128xf32>
    %19 = arith.addf %16, %18 : vector<8x128xf32>
    %c0_15 = arith.constant 0 : index
    %c0_16 = arith.constant 0 : index
    %20 = vector.load %arg8[%c0_15, %c0_16] : memref<8x128xf32, #tpu.memory_space<vmem>>, vector<8x128xf32>
    tpu.vector_store %arg8[%c0_15, %c0_16], %19 {strides = array<i32>} : memref<8x128xf32, #tpu.memory_space<vmem>>, vector<8x128xf32>,
    return
  }
  func.func @transform_0(%arg0: i32) -> (i32, i32) {
    %c0_i32 = arith.constant 0 : i32
    %c0_i32_0 = arith.constant 0 : i32
    return %c0_i32, %arg0 : i32, i32
  }
  func.func @transform_1(%arg0: i32) -> (i32, i32) {
    %c0_i32 = arith.constant 0 : i32
    %c0_i32_0 = arith.constant 0 : i32
    %c0_i32_1 = arith.constant 0 : i32
    return %c0_i32, %c0_i32_0 : i32, i32
  }
  func.func @transform_2(%arg0: i32) -> (i32, i32) {
    %c0_i32 = arith.constant 0 : i32
    %c0_i32_0 = arith.constant 0 : i32
    %c0_i32_1 = arith.constant 0 : i32
    return %c0_i32, %c0_i32_0 : i32, i32
  }
  func.func @transform_3(%arg0: i32) -> (i32, i32) {
    %c0_i32 = arith.constant 0 : i32
    %c0_i32_0 = arith.constant 0 : i32
    %c0_i32_1 = arith.constant 0 : i32
    return %c0_i32, %c0_i32_0 : i32, i32
  }
  func.func @transform_4(%arg0: i32) -> (i32, i32) {
    %c0_i32 = arith.constant 0 : i32
    %c0_i32_0 = arith.constant 0 : i32
    %c0_i32_1 = arith.constant 0 : i32
    return %c0_i32, %c0_i32_0 : i32, i32
  }
  func.func @transform_5(%arg0: i32) -> (i32, i32) {
    %c0_i32 = arith.constant 0 : i32
    %c0_i32_0 = arith.constant 0 : i32
    %c0_i32_1 = arith.constant 0 : i32
    return %c0_i32, %c0_i32_0 : i32, i32
  }
  func.func @transform_6(%arg0: i32) -> (i32, i32) {
    %c0_i32 = arith.constant 0 : i32
    %c0_i32_0 = arith.constant 0 : i32
    %c0_i32_1 = arith.constant 0 : i32
    return %c0_i32, %c0_i32_0 : i32, i32
  }
  func.func @transform_7(%arg0: i32) -> (i32, i32) {
    %c0_i32 = arith.constant 0 : i32
    %c0_i32_0 = arith.constant 0 : i32
    return %c0_i32, %arg0 : i32, i32
  }
}

</mosaic_0001>

<llo_original>
// kernel: tpu_custom_call.1
$region0: #{tpu_custom_call.1}
  #allocation0 [shape = 'u32[]', space=smem, size = 0x4, offset = 0x4, fixed_abs, tag = 'smem constant byte address 0x4 - core index']
  #allocation1 [shape = 'u32[144,128]{1,0:T(1,128)}', space=vmem, size = 0x12000, scoped, tag = 'internal scratch']
  %s0 = inlined_call_operand.vmem [shape: bf16[40,128], index: 0, kind: input, shape index: {}]
  %s1 = inlined_call_operand.vmem [shape: bf16[256,40], index: 1, kind: input, shape index: {}]
  %s2 = inlined_call_operand.vmem [shape: f32[256,1], index: 2, kind: input, shape index: {}]
  %s3 = inlined_call_operand.vmem [shape: bf16[112,256], index: 3, kind: input, shape index: {}]
  %s4 = inlined_call_operand.vmem [shape: f32[112,1], index: 4, kind: input, shape index: {}]
  %s5 = inlined_call_operand.vmem [shape: bf16[8,112], index: 5, kind: input, shape index: {}]
  %s6 = inlined_call_operand.vmem [shape: f32[8,1], index: 6, kind: input, shape index: {}]
  %s7 = inlined_call_operand.hbm [shape: f32[8,128], index: 7, kind: output, shape index: {}]
  %s8 = sld [smem:[#allocation0]]
  $region38: #{tpu_custom_call.1} parent=0
    _
  %s10 = ssub.s32 1, %s8
  %s11 = scalar_select 0, %s10, %s8
  $region1: #{tpu_custom_call.1} parent=0
    #allocation2 [shape = 'u8[4096]{0}', space=vmem, size = 0x1000, scoped, tag = 'output window, operand 0, single buffered']
    #allocation3 [shape = 's32[1]{0}', space=sflag, size = 0x4, scoped, tag = 'scoped memory for tpu_custom_call.1']
    %12 = vsyncpa [#allocation3], 0
    // Predicated region
    $region2: #{tpu_custom_call.1} parent=1 // pred_check
      _
    $region3: #{tpu_custom_call.1} parent=1 // pred_check_branch
      %14 = sbr.rel (0) target = $region5
    $region4: #{tpu_custom_call.1} parent=1 // pred_region
      _
    $region5: #{tpu_custom_call.1} parent=1 // pred_fallthru
      _
    // Predicated region
    $region6: #{tpu_custom_call.1} parent=1 // pred_check
      _
    $region7: #{tpu_custom_call.1} parent=1 // pred_check_branch
      %16 = sbr.rel (0) target = $region9
    $region8: #{tpu_custom_call.1} parent=1 // pred_region
      _
    $region9: #{tpu_custom_call.1} parent=1 // pred_fallthru
      _
    // Predicated region
    $region10: #{tpu_custom_call.1} parent=1 // pred_check
      _
    $region11: #{tpu_custom_call.1} parent=1 // pred_check_branch
      %18 = sbr.rel (0) target = $region13
    $region12: #{tpu_custom_call.1} parent=1 // pred_region
      _
    $region13: #{tpu_custom_call.1} parent=1 // pred_fallthru
      _
    // Predicated region
    $region14: #{tpu_custom_call.1} parent=1 // pred_check
      _
    $region15: #{tpu_custom_call.1} parent=1 // pred_check_branch
      %20 = sbr.rel (0) target = $region17
    $region16: #{tpu_custom_call.1} parent=1 // pred_region
      _
    $region17: #{tpu_custom_call.1} parent=1 // pred_fallthru
      _
    // Predicated region
    $region18: #{tpu_custom_call.1} parent=1 // pred_check
      _
    $region19: #{tpu_custom_call.1} parent=1 // pred_check_branch
      %22 = sbr.rel (0) target = $region21
    $region20: #{tpu_custom_call.1} parent=1 // pred_region
      _
    $region21: #{tpu_custom_call.1} parent=1 // pred_fallthru
      _
    // Predicated region
    $region22: #{tpu_custom_call.1} parent=1 // pred_check
      _
    $region23: #{tpu_custom_call.1} parent=1 // pred_check_branch
      %24 = sbr.rel (0) target = $region25
    $region24: #{tpu_custom_call.1} parent=1 // pred_region
      _
    $region25: #{tpu_custom_call.1} parent=1 // pred_fallthru
      _
    // Predicated region
    $region26: #{tpu_custom_call.1} parent=1 // pred_check
      _
    $region27: #{tpu_custom_call.1} parent=1 // pred_check_branch
      %26 = sbr.rel (0) target = $region29
    $region28: #{tpu_custom_call.1} parent=1 // pred_region
      _
    $region29: #{tpu_custom_call.1} parent=1 // pred_fallthru
      _
    %v28 = vld [vmem:[%s0] sm:$0xf]
    %v29 = vld [vmem:[%s0 + $0x4] sm:$0xf]
    %v30 = vld [vmem:[%s0 + $0x8] sm:$0xf]
    %v31 = vld [vmem:[%s0 + $0xc] sm:$0xf]
    %v32 = vld [vmem:[%s0 + $0x10] sm:$0xf]
    %v33 = vld [vmem:[%s1] sm:$0xf]
    %v34 = vld [vmem:[%s1 + $0x4] sm:$0xf]
    %v35 = vld [vmem:[%s1 + $0x8] sm:$0xf]
    %v36 = vld [vmem:[%s1 + $0xc] sm:$0xf]
    %v37 = vld [vmem:[%s1 + $0x10] sm:$0xf]
    %v38 = vld [vmem:[%s1 + $0x14] sm:$0xf]
    %v39 = vld [vmem:[%s1 + $0x18] sm:$0xf]
    %v40 = vld [vmem:[%s1 + $0x1c] sm:$0xf]
    %v41 = vld [vmem:[%s1 + $0x20] sm:$0xf]
    %v42 = vld [vmem:[%s1 + $0x24] sm:$0xf]
    %v43 = vld [vmem:[%s1 + $0x28] sm:$0xf]
    %v44 = vld [vmem:[%s1 + $0x2c] sm:$0xf]
    %v45 = vld [vmem:[%s1 + $0x30] sm:$0xf]
    %v46 = vld [vmem:[%s1 + $0x34] sm:$0xf]
    %v47 = vld [vmem:[%s1 + $0x38] sm:$0xf]
    %v48 = vld [vmem:[%s1 + $0x3c] sm:$0xf]
    %v49 = vld [vmem:[%s1 + $0x40] sm:$0xf]
    %v50 = vld [vmem:[%s1 + $0x44] sm:$0xf]
    %v51 = vld [vmem:[%s1 + $0x48] sm:$0xf]
    %v52 = vld [vmem:[%s1 + $0x4c] sm:$0xf]
    %v53 = vld [vmem:[%s1 + $0x50] sm:$0xf]
    %v54 = vld [vmem:[%s1 + $0x54] sm:$0xf]
    %v55 = vld [vmem:[%s1 + $0x58] sm:$0xf]
    %v56 = vld [vmem:[%s1 + $0x5c] sm:$0xf]
    %v57 = vld [vmem:[%s1 + $0x60] sm:$0xf]
    %v58 = vld [vmem:[%s1 + $0x64] sm:$0xf]
    %v59 = vld [vmem:[%s1 + $0x68] sm:$0xf]
    %v60 = vld [vmem:[%s1 + $0x6c] sm:$0xf]
    %v61 = vld [vmem:[%s1 + $0x70] sm:$0xf]
    %v62 = vld [vmem:[%s1 + $0x74] sm:$0xf]
    %v63 = vld [vmem:[%s1 + $0x78] sm:$0xf]
    %v64 = vld [vmem:[%s1 + $0x7c] sm:$0xf]
    %v65 = vld [vmem:[%s2] sm:$0xff]
    %v66 = vld [vmem:[%s2 + $0x8] sm:$0xff]
    %v67 = vld [vmem:[%s2 + $0x10] sm:$0xff]
    %v68 = vld [vmem:[%s2 + $0x18] sm:$0xff]
    %v69 = vld [vmem:[%s2 + $0x20] sm:$0xff]
    %v70 = vld [vmem:[%s2 + $0x28] sm:$0xff]
    %v71 = vld [vmem:[%s2 + $0x30] sm:$0xff]
    %v72 = vld [vmem:[%s2 + $0x38] sm:$0xff]
    %v73 = vld [vmem:[%s2 + $0x40] sm:$0xff]
    %v74 = vld [vmem:[%s2 + $0x48] sm:$0xff]
    %v75 = vld [vmem:[%s2 + $0x50] sm:$0xff]
    %v76 = vld [vmem:[%s2 + $0x58] sm:$0xff]
    %v77 = vld [vmem:[%s2 + $0x60] sm:$0xff]
    %v78 = vld [vmem:[%s2 + $0x68] sm:$0xff]
    %v79 = vld [vmem:[%s2 + $0x70] sm:$0xff]
    %v80 = vld [vmem:[%s2 + $0x78] sm:$0xff]
    %v81 = vld [vmem:[%s2 + $0x80] sm:$0xff]
    %v82 = vld [vmem:[%s2 + $0x88] sm:$0xff]
    %v83 = vld [vmem:[%s2 + $0x90] sm:$0xff]
    %v84 = vld [vmem:[%s2 + $0x98] sm:$0xff]
    %v85 = vld [vmem:[%s2 + $0xa0] sm:$0xff]
    %v86 = vld [vmem:[%s2 + $0xa8] sm:$0xff]
    %v87 = vld [vmem:[%s2 + $0xb0] sm:$0xff]
    %v88 = vld [vmem:[%s2 + $0xb8] sm:$0xff]
    %v89 = vld [vmem:[%s2 + $0xc0] sm:$0xff]
    %v90 = vld [vmem:[%s2 + $0xc8] sm:$0xff]
    %v91 = vld [vmem:[%s2 + $0xd0] sm:$0xff]
    %v92 = vld [vmem:[%s2 + $0xd8] sm:$0xff]
    %v93 = vld [vmem:[%s2 + $0xe0] sm:$0xff]
    %v94 = vld [vmem:[%s2 + $0xe8] sm:$0xff]
    %v95 = vld [vmem:[%s2 + $0xf0] sm:$0xff]
    %v96 = vld [vmem:[%s2 + $0xf8] sm:$0xff]
    %98 = vset.pattern.permute.xlu0 0
    %99 = vperm.xlu0 %98, %v65
    %v100 = vpop.permute.xlu0 %99
    %103 = vset.pattern.permute.xlu0 0
    %104 = vperm.xlu0 %103, %v66
    %v105 = vpop.permute.xlu0 %104
    %108 = vset.pattern.permute.xlu0 0
    %109 = vperm.xlu0 %108, %v67
    %v110 = vpop.permute.xlu0 %109
    %113 = vset.pattern.permute.xlu0 0
    %114 = vperm.xlu0 %113, %v68
    %v115 = vpop.permute.xlu0 %114
    %118 = vset.pattern.permute.xlu0 0
    %119 = vperm.xlu0 %118, %v69
    %v120 = vpop.permute.xlu0 %119
    %123 = vset.pattern.permute.xlu0 0
    %124 = vperm.xlu0 %123, %v70
    %v125 = vpop.permute.xlu0 %124
    %128 = vset.pattern.permute.xlu0 0
    %129 = vperm.xlu0 %128, %v71
    %v130 = vpop.permute.xlu0 %129
    %133 = vset.pattern.permute.xlu0 0
    %134 = vperm.xlu0 %133, %v72
    %v135 = vpop.permute.xlu0 %134
    %138 = vset.pattern.permute.xlu0 0
    %139 = vperm.xlu0 %138, %v73
    %v140 = vpop.permute.xlu0 %139
    %143 = vset.pattern.permute.xlu0 0
    %144 = vperm.xlu0 %143, %v74
    %v145 = vpop.permute.xlu0 %144
    %148 = vset.pattern.permute.xlu0 0
    %149 = vperm.xlu0 %148, %v75
    %v150 = vpop.permute.xlu0 %149
    %153 = vset.pattern.permute.xlu0 0
    %154 = vperm.xlu0 %153, %v76
    %v155 = vpop.permute.xlu0 %154
    %158 = vset.pattern.permute.xlu0 0
    %159 = vperm.xlu0 %158, %v77
    %v160 = vpop.permute.xlu0 %159
    %163 = vset.pattern.permute.xlu0 0
    %164 = vperm.xlu0 %163, %v78
    %v165 = vpop.permute.xlu0 %164
    %168 = vset.pattern.permute.xlu0 0
    %169 = vperm.xlu0 %168, %v79
    %v170 = vpop.permute.xlu0 %169
    %173 = vset.pattern.permute.xlu0 0
    %174 = vperm.xlu0 %173, %v80
    %v175 = vpop.permute.xlu0 %174
    %178 = vset.pattern.permute.xlu0 0
    %179 = vperm.xlu0 %178, %v81
    %v180 = vpop.permute.xlu0 %179
    %183 = vset.pattern.permute.xlu0 0
    %184 = vperm.xlu0 %183, %v82
    %v185 = vpop.permute.xlu0 %184
    %188 = vset.pattern.permute.xlu0 0
    %189 = vperm.xlu0 %188, %v83
    %v190 = vpop.permute.xlu0 %189
    %193 = vset.pattern.permute.xlu0 0
    %194 = vperm.xlu0 %193, %v84
    %v195 = vpop.permute.xlu0 %194
    %198 = vset.pattern.permute.xlu0 0
    %199 = vperm.xlu0 %198, %v85
    %v200 = vpop.permute.xlu0 %199
    %203 = vset.pattern.permute.xlu0 0
    %204 = vperm.xlu0 %203, %v86
    %v205 = vpop.permute.xlu0 %204
    %208 = vset.pattern.permute.xlu0 0
    %209 = vperm.xlu0 %208, %v87
    %v210 = vpop.permute.xlu0 %209
    %213 = vset.pattern.permute.xlu0 0
    %214 = vperm.xlu0 %213, %v88
    %v215 = vpop.permute.xlu0 %214
    %218 = vset.pattern.permute.xlu0 0
    %219 = vperm.xlu0 %218, %v89
    %v220 = vpop.permute.xlu0 %219
    %223 = vset.pattern.permute.xlu0 0
    %224 = vperm.xlu0 %223, %v90
    %v225 = vpop.permute.xlu0 %224
    %228 = vset.pattern.permute.xlu0 0
    %229 = vperm.xlu0 %228, %v91
    %v230 = vpop.permute.xlu0 %229
    %233 = vset.pattern.permute.xlu0 0
    %234 = vperm.xlu0 %233, %v92
    %v235 = vpop.permute.xlu0 %234
    %238 = vset.pattern.permute.xlu0 0
    %239 = vperm.xlu0 %238, %v93
    %v240 = vpop.permute.xlu0 %239
    %243 = vset.pattern.permute.xlu0 0
    %244 = vperm.xlu0 %243, %v94
    %v245 = vpop.permute.xlu0 %244
    %248 = vset.pattern.permute.xlu0 0
    %249 = vperm.xlu0 %248, %v95
    %v250 = vpop.permute.xlu0 %249
    %253 = vset.pattern.permute.xlu0 0
    %254 = vperm.xlu0 %253, %v96
    %v255 = vpop.permute.xlu0 %254
    %v289 = vunpack.c.l.b16 %v33
    %v290 = vunpack.c.l.b16 %v34
    %v291 = vunpack.c.l.b16 %v35
    %v292 = vunpack.c.l.b16 %v36
    %v293 = vunpack.c.l.b16 %v37
    %v294 = vunpack.c.l.b16 %v38
    %v295 = vunpack.c.l.b16 %v39
    %v296 = vunpack.c.l.b16 %v40
    %v297 = vunpack.c.l.b16 %v41
    %v298 = vunpack.c.l.b16 %v42
    %v299 = vunpack.c.l.b16 %v43
    %v300 = vunpack.c.l.b16 %v44
    %v301 = vunpack.c.l.b16 %v45
    %v302 = vunpack.c.l.b16 %v46
    %v303 = vunpack.c.l.b16 %v47
    %v304 = vunpack.c.l.b16 %v48
    %v305 = vunpack.c.l.b16 %v49
    %v306 = vunpack.c.l.b16 %v50
    %v307 = vunpack.c.l.b16 %v51
    %v308 = vunpack.c.l.b16 %v52
    %v309 = vunpack.c.l.b16 %v53
    %v310 = vunpack.c.l.b16 %v54
    %v311 = vunpack.c.l.b16 %v55
    %v312 = vunpack.c.l.b16 %v56
    %v313 = vunpack.c.l.b16 %v57
    %v314 = vunpack.c.l.b16 %v58
    %v315 = vunpack.c.l.b16 %v59
    %v316 = vunpack.c.l.b16 %v60
    %v317 = vunpack.c.l.b16 %v61
    %v318 = vunpack.c.l.b16 %v62
    %v319 = vunpack.c.l.b16 %v63
    %v320 = vunpack.c.l.b16 %v64
    %v321 = vpack.c.b16 %v290, %v289
    %v322 = vpack.c.b16 %v292, %v291
    %v323 = vpack.c.b16 %v294, %v293
    %v324 = vpack.c.b16 %v296, %v295
    %v325 = vpack.c.b16 %v298, %v297
    %v326 = vpack.c.b16 %v300, %v299
    %v327 = vpack.c.b16 %v302, %v301
    %v328 = vpack.c.b16 %v304, %v303
    %v329 = vpack.c.b16 %v306, %v305
    %v330 = vpack.c.b16 %v308, %v307
    %v331 = vpack.c.b16 %v310, %v309
    %v332 = vpack.c.b16 %v312, %v311
    %v333 = vpack.c.b16 %v314, %v313
    %v334 = vpack.c.b16 %v316, %v315
    %v335 = vpack.c.b16 %v318, %v317
    %v336 = vpack.c.b16 %v320, %v319
    %v342 = vunpack.c.l.b16 %v28
    %v343 = vunpack.c.l.b16 %v29
    %v344 = vunpack.c.l.b16 %v30
    %v345 = vunpack.c.l.b16 %v31
    %v346 = vunpack.c.l.b16 %v32
    %v347 = vpack.c.b16 %v343, %v342
    %v348 = vpack.c.b16 %v345, %v344
    %v349 = vpack.c.b16 %v346, %v346
    %vm352 = vcmask 326656
    %v354 = vsel %vm352, %v321, 0
    %v357 = vsel %vm352, %v322, 0
    %v360 = vsel %vm352, %v323, 0
    %v363 = vsel %vm352, %v324, 0
    %v366 = vsel %vm352, %v325, 0
    %v369 = vsel %vm352, %v326, 0
    %v372 = vsel %vm352, %v327, 0
    %v375 = vsel %vm352, %v328, 0
    %v378 = vsel %vm352, %v329, 0
    %v381 = vsel %vm352, %v330, 0
    %v384 = vsel %vm352, %v331, 0
    %v387 = vsel %vm352, %v332, 0
    %v390 = vsel %vm352, %v333, 0
    %v393 = vsel %vm352, %v334, 0
    %v396 = vsel %vm352, %v335, 0
    %v399 = vsel %vm352, %v336, 0
    %vm401 = vcmask 1043456
    %v403 = vsel %vm401, %v349, 0
    %405 = vmatprep.subr.bf16.mxu0 0
    %406 = vmatpush1.bf16.msra.mxu0 0
    %407 = vmatprep.subr.bf16.mxu0 0
    %408 = vmatpush1.bf16.msra.mxu0 0
    %409 = vmatprep.subr.bf16.mxu0 0
    %410 = vmatpush1.bf16.msra.mxu0 0
    %411 = vmatprep.subr.bf16.mxu0 0
    %412 = vmatpush1.bf16.msra.mxu0 0
    %413 = vmatprep.subr.bf16.mxu0 0
    %414 = vmatpush1.bf16.msra.mxu0 0
    %415 = vmatprep.subr.bf16.mxu0 0
    %416 = vmatpush1.bf16.msra.mxu0 %v403
    %417 = vmatprep.subr.bf16.mxu0 0
    %418 = vmatpush1.bf16.msra.mxu0 %v348
    %419 = vmatprep.subr.bf16.mxu0 0
    %420 = vmatpush1.bf16.msra.mxu0 %v347
    %421 = vmatprep.subr.bf16.mxu0 0
    %422 = vmatpush2.bf16.msra.mxu0 0
    %423 = vmatprep.subr.bf16.mxu0 0
    %424 = vmatpush2.bf16.msra.mxu0 0
    %425 = vmatprep.subr.bf16.mxu0 0
    %426 = vmatpush2.bf16.msra.mxu0 0
    %427 = vmatprep.subr.bf16.mxu0 0
    %428 = vmatpush2.bf16.msra.mxu0 0
    %429 = vmatprep.subr.bf16.mxu0 0
    %430 = vmatpush2.bf16.msra.mxu0 0
    %431 = vmatprep.subr.bf16.mxu0 0
    %432 = vmatpush2.bf16.msra.mxu0 0
    %433 = vmatprep.subr.bf16.mxu0 0
    %434 = vmatpush2.bf16.msra.mxu0 0
    %435 = vmatprep.subr.bf16.mxu0 0
    %436 = vmatpush2.bf16.msra.mxu0 0
    %437 = vmatprep.mubr.bf16.mxu0 0
    %438 = vmatmul.mubr.bf16.gmra.mxu0 %v354
    %v439 = vpop.f32.mrf.mxu0
    %v440 = vadd.f32 %v100, %v439
    %v441 = vpop.f32.mrf.mxu0
    %v442 = vpop.f32.mrf.mxu0
    %v443 = vadd.f32 %v105, %v442
    %v444 = vpop.f32.mrf.mxu0
    %445 = vmatprep.mubr.bf16.mxu0 0
    %446 = vmatmul.mubr.bf16.gmra.mxu0 %v357
    %v447 = vpop.f32.mrf.mxu0
    %v448 = vadd.f32 %v110, %v447
    %v449 = vpop.f32.mrf.mxu0
    %v450 = vpop.f32.mrf.mxu0
    %v451 = vadd.f32 %v115, %v450
    %v452 = vpop.f32.mrf.mxu0
    %453 = vmatprep.mubr.bf16.mxu0 0
    %454 = vmatmul.mubr.bf16.gmra.mxu0 %v360
    %v455 = vpop.f32.mrf.mxu0
    %v456 = vadd.f32 %v120, %v455
    %v457 = vpop.f32.mrf.mxu0
    %v458 = vpop.f32.mrf.mxu0
    %v459 = vadd.f32 %v125, %v458
    %v460 = vpop.f32.mrf.mxu0
    %461 = vmatprep.mubr.bf16.mxu0 0
    %462 = vmatmul.mubr.bf16.gmra.mxu0 %v363
    %v463 = vpop.f32.mrf.mxu0
    %v464 = vadd.f32 %v130, %v463
    %v465 = vpop.f32.mrf.mxu0
    %v466 = vpop.f32.mrf.mxu0
    %v467 = vadd.f32 %v135, %v466
    %v468 = vpop.f32.mrf.mxu0
    %469 = vmatprep.mubr.bf16.mxu0 0
    %470 = vmatmul.mubr.bf16.gmra.mxu0 %v366
    %v471 = vpop.f32.mrf.mxu0
    %v472 = vadd.f32 %v140, %v471
    %v473 = vpop.f32.mrf.mxu0
    %v474 = vpop.f32.mrf.mxu0
    %v475 = vadd.f32 %v145, %v474
    %v476 = vpop.f32.mrf.mxu0
    %477 = vmatprep.mubr.bf16.mxu0 0
    %478 = vmatmul.mubr.bf16.gmra.mxu0 %v369
    %v479 = vpop.f32.mrf.mxu0
    %v480 = vadd.f32 %v150, %v479
    %v481 = vpop.f32.mrf.mxu0
    %v482 = vpop.f32.mrf.mxu0
    %v483 = vadd.f32 %v155, %v482
    %v484 = vpop.f32.mrf.mxu0
    %485 = vmatprep.mubr.bf16.mxu0 0
    %486 = vmatmul.mubr.bf16.gmra.mxu0 %v372
    %v487 = vpop.f32.mrf.mxu0
    %v488 = vadd.f32 %v160, %v487
    %v489 = vpop.f32.mrf.mxu0
    %v490 = vpop.f32.mrf.mxu0
    %v491 = vadd.f32 %v165, %v490
    %v492 = vpop.f32.mrf.mxu0
    %493 = vmatprep.mubr.bf16.mxu0 0
    %494 = vmatmul.mubr.bf16.gmra.mxu0 %v375
    %v495 = vpop.f32.mrf.mxu0
    %v496 = vadd.f32 %v170, %v495
    %v497 = vpop.f32.mrf.mxu0
    %v498 = vpop.f32.mrf.mxu0
    %v499 = vadd.f32 %v175, %v498
    %v500 = vpop.f32.mrf.mxu0
    %501 = vmatprep.mubr.bf16.mxu0 0
    %502 = vmatmul.mubr.bf16.gmra.mxu0 %v378
    %v503 = vpop.f32.mrf.mxu0
    %v504 = vadd.f32 %v180, %v503
    %v505 = vpop.f32.mrf.mxu0
    %v506 = vpop.f32.mrf.mxu0
    %v507 = vadd.f32 %v185, %v506
    %v508 = vpop.f32.mrf.mxu0
    %509 = vmatprep.mubr.bf16.mxu0 0
    %510 = vmatmul.mubr.bf16.gmra.mxu0 %v381
    %v511 = vpop.f32.mrf.mxu0
    %v512 = vadd.f32 %v190, %v511
    %v513 = vpop.f32.mrf.mxu0
    %v514 = vpop.f32.mrf.mxu0
    %v515 = vadd.f32 %v195, %v514
    %v516 = vpop.f32.mrf.mxu0
    %517 = vmatprep.mubr.bf16.mxu0 0
    %518 = vmatmul.mubr.bf16.gmra.mxu0 %v384
    %v519 = vpop.f32.mrf.mxu0
    %v520 = vadd.f32 %v200, %v519
    %v521 = vpop.f32.mrf.mxu0
    %v522 = vpop.f32.mrf.mxu0
    %v523 = vadd.f32 %v205, %v522
    %v524 = vpop.f32.mrf.mxu0
    %525 = vmatprep.mubr.bf16.mxu0 0
    %526 = vmatmul.mubr.bf16.gmra.mxu0 %v387
    %v527 = vpop.f32.mrf.mxu0
    %v528 = vadd.f32 %v210, %v527
    %v529 = vpop.f32.mrf.mxu0
    %v530 = vpop.f32.mrf.mxu0
    %v531 = vadd.f32 %v215, %v530
    %v532 = vpop.f32.mrf.mxu0
    %533 = vmatprep.mubr.bf16.mxu0 0
    %534 = vmatmul.mubr.bf16.gmra.mxu0 %v390
    %v535 = vpop.f32.mrf.mxu0
    %v536 = vadd.f32 %v220, %v535
    %v537 = vpop.f32.mrf.mxu0
    %v538 = vpop.f32.mrf.mxu0
    %v539 = vadd.f32 %v225, %v538
    %v540 = vpop.f32.mrf.mxu0
    %541 = vmatprep.mubr.bf16.mxu0 0
    %542 = vmatmul.mubr.bf16.gmra.mxu0 %v393
    %v543 = vpop.f32.mrf.mxu0
    %v544 = vadd.f32 %v230, %v543
    %v545 = vpop.f32.mrf.mxu0
    %v546 = vpop.f32.mrf.mxu0
    %v547 = vadd.f32 %v235, %v546
    %v548 = vpop.f32.mrf.mxu0
    %549 = vmatprep.mubr.bf16.mxu0 0
    %550 = vmatmul.mubr.bf16.gmra.mxu0 %v396
    %v551 = vpop.f32.mrf.mxu0
    %v552 = vadd.f32 %v240, %v551
    %v553 = vpop.f32.mrf.mxu0
    %v554 = vpop.f32.mrf.mxu0
    %v555 = vadd.f32 %v245, %v554
    %v556 = vpop.f32.mrf.mxu0
    %557 = vmatprep.mubr.bf16.mxu0 0
    %558 = vmatmul.mubr.bf16.gmra.mxu0 %v399
    %v559 = vpop.f32.mrf.mxu0
    %v560 = vadd.f32 %v250, %v559
    %v561 = vpop.f32.mrf.mxu0
    %v562 = vpop.f32.mrf.mxu0
    %v563 = vadd.f32 %v255, %v562
    %v564 = vpop.f32.mrf.mxu0
    %565 = vdwg.mxu0
    %v566 = vpack.c.bf16 %v443, %v440
    %v567 = vpack.c.bf16 %v451, %v448
    %v568 = vpack.c.bf16 %v459, %v456
    %v569 = vpack.c.bf16 %v467, %v464
    %v570 = vpack.c.bf16 %v475, %v472
    %v571 = vpack.c.bf16 %v483, %v480
    %v572 = vpack.c.bf16 %v491, %v488
    %v573 = vpack.c.bf16 %v499, %v496
    %v574 = vpack.c.bf16 %v507, %v504
    %v575 = vpack.c.bf16 %v515, %v512
    %v576 = vpack.c.bf16 %v523, %v520
    %v577 = vpack.c.bf16 %v531, %v528
    %v578 = vpack.c.bf16 %v539, %v536
    %v579 = vpack.c.bf16 %v547, %v544
    %v580 = vpack.c.bf16 %v555, %v552
    %v581 = vpack.c.bf16 %v563, %v560
    %v582 = vtanh.bf16.pop %v566
    %v583 = vtanh.bf16.pop %v567
    %v584 = vtanh.bf16.pop %v568
    %v585 = vtanh.bf16.pop %v569
    %v586 = vtanh.bf16.pop %v570
    %v587 = vtanh.bf16.pop %v571
    %v588 = vtanh.bf16.pop %v572
    %v589 = vtanh.bf16.pop %v573
    %v590 = vtanh.bf16.pop %v574
    %v591 = vtanh.bf16.pop %v575
    %v592 = vtanh.bf16.pop %v576
    %v593 = vtanh.bf16.pop %v577
    %v594 = vtanh.bf16.pop %v578
    %v595 = vtanh.bf16.pop %v579
    %v596 = vtanh.bf16.pop %v580
    %v597 = vtanh.bf16.pop %v581
    %v598 = vld [vmem:[%s3] sm:$0xff]
    %v599 = vld [vmem:[%s3 + $0x8] sm:$0xff]
    %v600 = vld [vmem:[%s3 + $0x10] sm:$0xff]
    %v601 = vld [vmem:[%s3 + $0x18] sm:$0xff]
    %v602 = vld [vmem:[%s3 + $0x20] sm:$0xff]
    %v603 = vld [vmem:[%s3 + $0x28] sm:$0xff]
    %v604 = vld [vmem:[%s3 + $0x30] sm:$0xff]
    %v605 = vld [vmem:[%s3 + $0x38] sm:$0xff]
    %v606 = vld [vmem:[%s3 + $0x40] sm:$0xff]
    %v607 = vld [vmem:[%s3 + $0x48] sm:$0xff]
    %v608 = vld [vmem:[%s3 + $0x50] sm:$0xff]
    %v609 = vld [vmem:[%s3 + $0x58] sm:$0xff]
    %v610 = vld [vmem:[%s3 + $0x60] sm:$0xff]
    %v611 = vld [vmem:[%s3 + $0x68] sm:$0xff]
    %v612 = vld [vmem:[%s4] sm:$0xff]
    %v613 = vld [vmem:[%s4 + $0x8] sm:$0xff]
    %v614 = vld [vmem:[%s4 + $0x10] sm:$0xff]
    %v615 = vld [vmem:[%s4 + $0x18] sm:$0xff]
    %v616 = vld [vmem:[%s4 + $0x20] sm:$0xff]
    %v617 = vld [vmem:[%s4 + $0x28] sm:$0xff]
    %v618 = vld [vmem:[%s4 + $0x30] sm:$0xff]
    %v619 = vld [vmem:[%s4 + $0x38] sm:$0xff]
    %v620 = vld [vmem:[%s4 + $0x40] sm:$0xff]
    %v621 = vld [vmem:[%s4 + $0x48] sm:$0xff]
    %v622 = vld [vmem:[%s4 + $0x50] sm:$0xff]
    %v623 = vld [vmem:[%s4 + $0x58] sm:$0xff]
    %v624 = vld [vmem:[%s4 + $0x60] sm:$0xff]
    %v625 = vld [vmem:[%s4 + $0x68] sm:$0xff]
    %627 = vset.pattern.permute.xlu0 0
    %628 = vperm.xlu0 %627, %v612
    %v629 = vpop.permute.xlu0 %628
    %632 = vset.pattern.permute.xlu0 0
    %633 = vperm.xlu0 %632, %v613
    %v634 = vpop.permute.xlu0 %633
    %637 = vset.pattern.permute.xlu0 0
    %638 = vperm.xlu0 %637, %v614
    %v639 = vpop.permute.xlu0 %638
    %642 = vset.pattern.permute.xlu0 0
    %643 = vperm.xlu0 %642, %v615
    %v644 = vpop.permute.xlu0 %643
    %647 = vset.pattern.permute.xlu0 0
    %648 = vperm.xlu0 %647, %v616
    %v649 = vpop.permute.xlu0 %648
    %652 = vset.pattern.permute.xlu0 0
    %653 = vperm.xlu0 %652, %v617
    %v654 = vpop.permute.xlu0 %653
    %657 = vset.pattern.permute.xlu0 0
    %658 = vperm.xlu0 %657, %v618
    %v659 = vpop.permute.xlu0 %658
    %662 = vset.pattern.permute.xlu0 0
    %663 = vperm.xlu0 %662, %v619
    %v664 = vpop.permute.xlu0 %663
    %667 = vset.pattern.permute.xlu0 0
    %668 = vperm.xlu0 %667, %v620
    %v669 = vpop.permute.xlu0 %668
    %672 = vset.pattern.permute.xlu0 0
    %673 = vperm.xlu0 %672, %v621
    %v674 = vpop.permute.xlu0 %673
    %677 = vset.pattern.permute.xlu0 0
    %678 = vperm.xlu0 %677, %v622
    %v679 = vpop.permute.xlu0 %678
    %682 = vset.pattern.permute.xlu0 0
    %683 = vperm.xlu0 %682, %v623
    %v684 = vpop.permute.xlu0 %683
    %687 = vset.pattern.permute.xlu0 0
    %688 = vperm.xlu0 %687, %v624
    %v689 = vpop.permute.xlu0 %688
    %692 = vset.pattern.permute.xlu0 0
    %693 = vperm.xlu0 %692, %v625
    %v694 = vpop.permute.xlu0 %693
    %v710 = vunpack.c.l.b16 %v598
    %v711 = vunpack.c.h.b16 %v598
    %v712 = vunpack.c.l.b16 %v599
    %v713 = vunpack.c.h.b16 %v599
    %v714 = vunpack.c.l.b16 %v600
    %v715 = vunpack.c.h.b16 %v600
    %v716 = vunpack.c.l.b16 %v601
    %v717 = vunpack.c.h.b16 %v601
    %v718 = vunpack.c.l.b16 %v602
    %v719 = vunpack.c.h.b16 %v602
    %v720 = vunpack.c.l.b16 %v603
    %v721 = vunpack.c.h.b16 %v603
    %v722 = vunpack.c.l.b16 %v604
    %v723 = vunpack.c.h.b16 %v604
    %v724 = vunpack.c.l.b16 %v605
    %v725 = vunpack.c.h.b16 %v605
    %v726 = vunpack.c.l.b16 %v606
    %v727 = vunpack.c.h.b16 %v606
    %v728 = vunpack.c.l.b16 %v607
    %v729 = vunpack.c.h.b16 %v607
    %v730 = vunpack.c.l.b16 %v608
    %v731 = vunpack.c.h.b16 %v608
    %v732 = vunpack.c.l.b16 %v609
    %v733 = vunpack.c.h.b16 %v609
    %v734 = vunpack.c.l.b16 %v610
    %v735 = vunpack.c.h.b16 %v610
    %v736 = vunpack.c.l.b16 %v611
    %v737 = vunpack.c.h.b16 %v611
    %v738 = vpack.c.b16 %v712, %v710
    %v739 = vpack.c.b16 %v713, %v711
    %v740 = vpack.c.b16 %v716, %v714
    %v741 = vpack.c.b16 %v717, %v715
    %v742 = vpack.c.b16 %v720, %v718
    %v743 = vpack.c.b16 %v721, %v719
    %v744 = vpack.c.b16 %v724, %v722
    %v745 = vpack.c.b16 %v725, %v723
    %v746 = vpack.c.b16 %v728, %v726
    %v747 = vpack.c.b16 %v729, %v727
    %v748 = vpack.c.b16 %v732, %v730
    %v749 = vpack.c.b16 %v733, %v731
    %v750 = vpack.c.b16 %v736, %v734
    %v751 = vpack.c.b16 %v737, %v735
    %766 = vmatprep.subr.bf16.mxu0 0
    %767 = vmatpush1.bf16.msra.mxu0 %v589
    %768 = vmatprep.subr.bf16.mxu0 0
    %769 = vmatpush1.bf16.msra.mxu0 %v588
    %770 = vmatprep.subr.bf16.mxu0 0
    %771 = vmatpush1.bf16.msra.mxu0 %v587
    %772 = vmatprep.subr.bf16.mxu0 0
    %773 = vmatpush1.bf16.msra.mxu0 %v586
    %774 = vmatprep.subr.bf16.mxu0 0
    %775 = vmatpush1.bf16.msra.mxu0 %v585
    %776 = vmatprep.subr.bf16.mxu0 0
    %777 = vmatpush1.bf16.msra.mxu0 %v584
    %778 = vmatprep.subr.bf16.mxu0 0
    %779 = vmatpush1.bf16.msra.mxu0 %v583
    %780 = vmatprep.subr.bf16.mxu0 0
    %781 = vmatpush1.bf16.msra.mxu0 %v582
    %782 = vmatprep.subr.bf16.mxu0 0
    %783 = vmatpush2.bf16.msra.mxu0 %v597
    %784 = vmatprep.subr.bf16.mxu0 0
    %785 = vmatpush2.bf16.msra.mxu0 %v596
    %786 = vmatprep.subr.bf16.mxu0 0
    %787 = vmatpush2.bf16.msra.mxu0 %v595
    %788 = vmatprep.subr.bf16.mxu0 0
    %789 = vmatpush2.bf16.msra.mxu0 %v594
    %790 = vmatprep.subr.bf16.mxu0 0
    %791 = vmatpush2.bf16.msra.mxu0 %v593
    %792 = vmatprep.subr.bf16.mxu0 0
    %793 = vmatpush2.bf16.msra.mxu0 %v592
    %794 = vmatprep.subr.bf16.mxu0 0
    %795 = vmatpush2.bf16.msra.mxu0 %v591
    %796 = vmatprep.subr.bf16.mxu0 0
    %797 = vmatpush2.bf16.msra.mxu0 %v590
    %798 = vmatprep.mubr.bf16.mxu0 %v739
    %799 = vmatmul.mubr.bf16.gmra.mxu0 %v738
    %v800 = vpop.f32.mrf.mxu0
    %v801 = vadd.f32 %v629, %v800
    %v802 = vpop.f32.mrf.mxu0
    %v803 = vpop.f32.mrf.mxu0
    %v804 = vadd.f32 %v634, %v803
    %v805 = vpop.f32.mrf.mxu0
    %806 = vmatprep.mubr.bf16.mxu0 %v741
    %807 = vmatmul.mubr.bf16.gmra.mxu0 %v740
    %v808 = vpop.f32.mrf.mxu0
    %v809 = vadd.f32 %v639, %v808
    %v810 = vpop.f32.mrf.mxu0
    %v811 = vpop.f32.mrf.mxu0
    %v812 = vadd.f32 %v644, %v811
    %v813 = vpop.f32.mrf.mxu0
    %814 = vmatprep.mubr.bf16.mxu0 %v743
    %815 = vmatmul.mubr.bf16.gmra.mxu0 %v742
    %v816 = vpop.f32.mrf.mxu0
    %v817 = vadd.f32 %v649, %v816
    %v818 = vpop.f32.mrf.mxu0
    %v819 = vpop.f32.mrf.mxu0
    %v820 = vadd.f32 %v654, %v819
    %v821 = vpop.f32.mrf.mxu0
    %822 = vmatprep.mubr.bf16.mxu0 %v745
    %823 = vmatmul.mubr.bf16.gmra.mxu0 %v744
    %v824 = vpop.f32.mrf.mxu0
    %v825 = vadd.f32 %v659, %v824
    %v826 = vpop.f32.mrf.mxu0
    %v827 = vpop.f32.mrf.mxu0
    %v828 = vadd.f32 %v664, %v827
    %v829 = vpop.f32.mrf.mxu0
    %830 = vmatprep.mubr.bf16.mxu0 %v747
    %831 = vmatmul.mubr.bf16.gmra.mxu0 %v746
    %v832 = vpop.f32.mrf.mxu0
    %v833 = vadd.f32 %v669, %v832
    %v834 = vpop.f32.mrf.mxu0
    %v835 = vpop.f32.mrf.mxu0
    %v836 = vadd.f32 %v674, %v835
    %v837 = vpop.f32.mrf.mxu0
    %838 = vmatprep.mubr.bf16.mxu0 %v749
    %839 = vmatmul.mubr.bf16.gmra.mxu0 %v748
    %v840 = vpop.f32.mrf.mxu0
    %v841 = vadd.f32 %v679, %v840
    %v842 = vpop.f32.mrf.mxu0
    %v843 = vpop.f32.mrf.mxu0
    %v844 = vadd.f32 %v684, %v843
    %v845 = vpop.f32.mrf.mxu0
    %846 = vmatprep.mubr.bf16.mxu0 %v751
    %847 = vmatmul.mubr.bf16.gmra.mxu0 %v750
    %v848 = vpop.f32.mrf.mxu0
    %v849 = vadd.f32 %v689, %v848
    %v850 = vpop.f32.mrf.mxu0
    %v851 = vpop.f32.mrf.mxu0
    %v852 = vadd.f32 %v694, %v851
    %v853 = vpop.f32.mrf.mxu0
    %854 = vdwg.mxu0
    %v855 = vpack.c.bf16 %v804, %v801
    %v856 = vpack.c.bf16 %v812, %v809
    %v857 = vpack.c.bf16 %v820, %v817
    %v858 = vpack.c.bf16 %v828, %v825
    %v859 = vpack.c.bf16 %v836, %v833
    %v860 = vpack.c.bf16 %v844, %v841
    %v861 = vpack.c.bf16 %v852, %v849
    %v862 = vtanh.bf16.pop %v855
    %v863 = vtanh.bf16.pop %v856
    %v864 = vtanh.bf16.pop %v857
    %v865 = vtanh.bf16.pop %v858
    %v866 = vtanh.bf16.pop %v859
    %v867 = vtanh.bf16.pop %v860
    %v868 = vtanh.bf16.pop %v861
    %v869 = vld [vmem:[%s5] sm:$0xf]
    %v870 = vld [vmem:[%s6] sm:$0xff]
    %872 = vset.pattern.permute.xlu0 0
    %873 = vperm.xlu0 %872, %v870
    %v874 = vpop.permute.xlu0 %873
    %vm876 = vcmask 916480
    %v878 = vsel %vm876, %v869, 0
    %880 = vmatprep.subr.bf16.mxu0 0
    %881 = vmatpush1.bf16.msra.mxu0 0
    %882 = vmatprep.subr.bf16.mxu0 0
    %883 = vmatpush1.bf16.msra.mxu0 %v868
    %884 = vmatprep.subr.bf16.mxu0 0
    %885 = vmatpush1.bf16.msra.mxu0 %v867
    %886 = vmatprep.subr.bf16.mxu0 0
    %887 = vmatpush1.bf16.msra.mxu0 %v866
    %888 = vmatprep.subr.bf16.mxu0 0
    %889 = vmatpush1.bf16.msra.mxu0 %v865
    %890 = vmatprep.subr.bf16.mxu0 0
    %891 = vmatpush1.bf16.msra.mxu0 %v864
    %892 = vmatprep.subr.bf16.mxu0 0
    %893 = vmatpush1.bf16.msra.mxu0 %v863
    %894 = vmatprep.subr.bf16.mxu0 0
    %895 = vmatpush1.bf16.msra.mxu0 %v862
    %896 = vmatprep.subr.bf16.mxu0 0
    %897 = vmatpush2.bf16.msra.mxu0 0
    %898 = vmatprep.subr.bf16.mxu0 0
    %899 = vmatpush2.bf16.msra.mxu0 0
    %900 = vmatprep.subr.bf16.mxu0 0
    %901 = vmatpush2.bf16.msra.mxu0 0
    %902 = vmatprep.subr.bf16.mxu0 0
    %903 = vmatpush2.bf16.msra.mxu0 0
    %904 = vmatprep.subr.bf16.mxu0 0
    %905 = vmatpush2.bf16.msra.mxu0 0
    %906 = vmatprep.subr.bf16.mxu0 0
    %907 = vmatpush2.bf16.msra.mxu0 0
    %908 = vmatprep.subr.bf16.mxu0 0
    %909 = vmatpush2.bf16.msra.mxu0 0
    %910 = vmatprep.subr.bf16.mxu0 0
    %911 = vmatpush2.bf16.msra.mxu0 0
    %912 = vmatprep.mubr.bf16.mxu0 0
    %913 = vmatmul.mubr.bf16.gmra.mxu0 %v878
    %v914 = vpop.f32.mrf.mxu0
    %v915 = vadd.f32 %v874, %v914
    %v916 = vpop.f32.mrf.mxu0
    %v917 = vpop.f32.mrf.mxu0
    %v918 = vpop.f32.mrf.mxu0
    %919 = vdwg.mxu0
    %920 = vst [vmem:[#allocation2] sm:$0xff] %v915
    // Predicated region
    $region30: #{tpu_custom_call.1} parent=1 // pred_check
      _
    $region31: #{tpu_custom_call.1} parent=1 // pred_check_branch
      %922 = sbr.rel (0) target = $region33
    $region32: #{tpu_custom_call.1} parent=1 // pred_region
      %s924 = ssub.s32 128, 128
      %925 = vsyncadd [#allocation3], %s924
      %s927 = sshll.u32 [#allocation2], 4
      %s928 = int_to_ptr.vmem [resolvable:$true] %s927
      %930 = dma.vmem_to_hbm [thread:$0]  %s928, 128, %s7, [#allocation3]
    $region33: #{tpu_custom_call.1} parent=1 // pred_fallthru
      _
    // Predicated region
    $region34: #{tpu_custom_call.1} parent=1 // pred_check
      _
    $region35: #{tpu_custom_call.1} parent=1 // pred_check_branch
      %932 = sbr.rel (0) target = $region37
    $region36: #{tpu_custom_call.1} parent=1 // pred_region
      %933 = dma.done [#allocation3], 128
    $region37: #{tpu_custom_call.1} parent=1 // pred_fallthru
      _
    %934 = vsyncpa [#allocation3], 1

</llo_original>
